<compile_context>
chip_gen: v7x
topology: tpu7x:2x2x1
jax: 0.10.0
libtpu: 0.0.40
codegen_flags: <defaults>
</compile_context>

<pallas_src>
import jax
import jax.numpy as jnp
from jax.experimental import pallas as pl
from jax.experimental.pallas import tpu as pltpu


def _phys_pos_enc_kernel(scalars_ref, x_ref, phys_ref, pe_l_ref, pe_d_ref, o_ref):
    """One grid step == one batch element. All tiles live in VMEM; scalars in SMEM."""
    mean = scalars_ref[0]       # scalar f32
    inv_std = scalars_ref[1]    # scalar f32 (precomputed reciprocal, no division in-kernel)

    x = x_ref[...].astype(jnp.float32)          # (1, S, D)
    phys = phys_ref[...].astype(jnp.float32)    # (1, S, D), already zero-padded to D
    pe_l = pe_l_ref[...].astype(jnp.float32)    # (S, D)
    pe_d = pe_d_ref[...].astype(jnp.float32)    # (S, D)

    # Combined positional term, broadcast over the (size-1) batch block dim.
    pe = pe_l + (pe_d - mean) * inv_std         # (S, D)

    o_ref[...] = (phys + x + x + pe[None, :, :]).astype(o_ref.dtype)


def physics_positional_encoding(x, physics_features, params):
    """x: (B, S, D); physics_features: (B, S, P) with P <= D.

    params:
      learnable_pe : (1, max_len, D)
      data_pe      : (1, max_len, D)
      mean, std    : arrays (any shape); module uses their scalar mean.
    """
    B, S, D = x.shape
    P = physics_features.shape[-1]
    assert P <= D, "physics feature dim must not exceed d_model"

    # Host-side layout plumbing: zero-pad physics features to d_model so all kernel
    # blocks are lane-dense (no unaligned lane slices / masked stores in-kernel).
    phys_padded = jnp.pad(physics_features, ((0, 0), (0, 0), (0, D - P)))

    pe_l = params["learnable_pe"][0, :S, :]     # (S, D)
    pe_d = params["data_pe"][0, :S, :]          # (S, D)

    mean = jnp.mean(params["mean"]).astype(jnp.float32)
    std = jnp.mean(params["std"]).astype(jnp.float32)
    scalars = jnp.stack([mean, 1.0 / std]).astype(jnp.float32)   # (2,) in SMEM

    # TODO(synk): for very large B one would group several batch elements per grid step
    # (block (Bt, S, D)) to amortize the ~0.35us per-step pipeline overhead; at these
    # shapes one batch element per step already keeps both v7x TensorCores busy.
    return pl.pallas_call(
        _phys_pos_enc_kernel,
        out_shape=jax.ShapeDtypeStruct((B, S, D), x.dtype),
        grid=(B,),
        in_specs=[
            pl.BlockSpec(memory_space=pltpu.MemorySpace.SMEM),     # [mean, 1/std]
            pl.BlockSpec((1, S, D), lambda b: (b, 0, 0)),          # x
            pl.BlockSpec((1, S, D), lambda b: (b, 0, 0)),          # padded physics features
            pl.BlockSpec((S, D), lambda b: (0, 0)),                # learnable PE slice
            pl.BlockSpec((S, D), lambda b: (0, 0)),                # data-aware PE slice
        ],
        out_specs=pl.BlockSpec((1, S, D), lambda b: (b, 0, 0)),
        compiler_params=pltpu.CompilerParams(dimension_semantics=("parallel",)),
    )(scalars, x, phys_padded, pe_l, pe_d)


def reference_forward(x, physics_features, params):
    """Pure-JAX reference matching the PyTorch module."""
    B, S, D = x.shape
    P = physics_features.shape[-1]
    mean = jnp.mean(params["mean"])
    std = jnp.mean(params["std"])

    learnable_encoding = x + params["learnable_pe"][:, :S, :]
    data_pe = params["data_pe"][:, :S, :]
    data_encoding = x + (data_pe - mean) / std
    physics_encoding = jnp.pad(physics_features, ((0, 0), (0, 0), (0, D - P)))
    return physics_encoding + data_encoding + learnable_encoding


if __name__ == "__main__":
    B = 2
    S = 16
    d_model = 32
    physics_dim = 9
    max_len = 352   # matches PhysicsPositionalEncoding default

    key = jax.random.PRNGKey(0)
    keys = jax.random.split(key, 6)

    x = jax.random.normal(keys[0], (B, S, d_model), jnp.float32)
    physics_features = jax.random.normal(keys[1], (B, S, physics_dim), jnp.float32)

    params = {
        # learnable PE (module inits to zeros; use random values for a non-trivial test)
        "learnable_pe": 0.1 * jax.random.normal(keys[2], (1, max_len, d_model), jnp.float32),
        # data-aware PE (module inits ~N(mean, 1e-6); random values for testing)
        "data_pe": 0.1 * jax.random.normal(keys[3], (1, max_len, d_model), jnp.float32),
        # data statistics fed to the module (any shape; forward uses their scalar mean)
        "mean": jax.random.normal(keys[4], (d_model,), jnp.float32),
        "std": 0.5 + jax.nn.softplus(jax.random.normal(keys[5], (d_model,), jnp.float32)),
    }

    out = physics_positional_encoding(x, physics_features, params)
    out = jax.block_until_ready(out)

    ref = reference_forward(x, physics_features, params)

    assert out.shape == (B, S, d_model)
    assert jnp.allclose(out, ref, rtol=1e-5, atol=1e-5), \
        f"max abs err = {jnp.max(jnp.abs(out - ref))}"

    print("KERNEL_OK")
</pallas_src>

<mosaic_0001>
module attributes {stable_mosaic.version = 11 : i64} {
  func.func @_phys_pos_enc_kernel(%arg0: i32, %arg1: memref<2xf32, #tpu.memory_space<smem>>, %arg2: memref<1x16x32xf32, #tpu.memory_space<vmem>>, %arg3: memref<1x16x32xf32, #tpu.memory_space<vmem>>, %arg4: memref<16x32xf32, #tpu.memory_space<vmem>>, %arg5: memref<16x32xf32, #tpu.memory_space<vmem>>, %arg6: memref<1x16x32xf32, #tpu.memory_space<vmem>>) attributes {dimension_semantics = [#tpu.dimension_semantics<parallel>], iteration_bounds = array<i64: 2>, scalar_prefetch = 0 : i64, scratch_operands = 0 : i64, tpu.core_type = #tpu.core_type<tc>, window_params = [{transform_indices = @transform_0, window_bounds = array<i64: 2>}, {transform_indices = @transform_1, window_bounds = array<i64: 1, 16, 32>}, {transform_indices = @transform_2, window_bounds = array<i64: 1, 16, 32>}, {pipeline_mode = #tpu.pipeline_mode<synchronous>, transform_indices = @transform_3, window_bounds = array<i64: 16, 32>}, {pipeline_mode = #tpu.pipeline_mode<synchronous>, transform_indices = @transform_4, window_bounds = array<i64: 16, 32>}, {transform_indices = @transform_5, window_bounds = array<i64: 1, 16, 32>}]} {
    %c0 = arith.constant 0 : index
    %0 = memref.load %arg1[%c0] : memref<2xf32, #tpu.memory_space<smem>>
    %c1 = arith.constant 1 : index
    %1 = memref.load %arg1[%c1] : memref<2xf32, #tpu.memory_space<smem>>
    %c0_0 = arith.constant 0 : index
    %c0_1 = arith.constant 0 : index
    %c0_2 = arith.constant 0 : index
    %2 = vector.load %arg2[%c0_0, %c0_1, %c0_2] : memref<1x16x32xf32, #tpu.memory_space<vmem>>, vector<1x16x32xf32>
    %c0_3 = arith.constant 0 : index
    %c0_4 = arith.constant 0 : index
    %c0_5 = arith.constant 0 : index
    %3 = vector.load %arg3[%c0_3, %c0_4, %c0_5] : memref<1x16x32xf32, #tpu.memory_space<vmem>>, vector<1x16x32xf32>
    %c0_6 = arith.constant 0 : index
    %c0_7 = arith.constant 0 : index
    %4 = vector.load %arg4[%c0_6, %c0_7] : memref<16x32xf32, #tpu.memory_space<vmem>>, vector<16x32xf32>
    %c0_8 = arith.constant 0 : index
    %c0_9 = arith.constant 0 : index
    %5 = vector.load %arg5[%c0_8, %c0_9] : memref<16x32xf32, #tpu.memory_space<vmem>>, vector<16x32xf32>
    %6 = vector.broadcast %0 : f32 to vector<16x32xf32>
    %7 = arith.subf %5, %6 : vector<16x32xf32>
    %8 = vector.broadcast %1 : f32 to vector<16x32xf32>
    %9 = arith.mulf %7, %8 : vector<16x32xf32>
    %10 = arith.addf %4, %9 : vector<16x32xf32>
    %11 = arith.addf %3, %2 : vector<1x16x32xf32>
    %12 = arith.addf %11, %2 : vector<1x16x32xf32>
    %13 = vector.shape_cast %10 : vector<16x32xf32> to vector<1x16x32xf32>
    %14 = arith.addf %12, %13 : vector<1x16x32xf32>
    %c0_10 = arith.constant 0 : index
    %c0_11 = arith.constant 0 : index
    %c0_12 = arith.constant 0 : index
    %15 = vector.load %arg6[%c0_10, %c0_11, %c0_12] : memref<1x16x32xf32, #tpu.memory_space<vmem>>, vector<1x16x32xf32>
    tpu.vector_store %arg6[%c0_10, %c0_11, %c0_12], %14 {strides = array<i32>} : memref<1x16x32xf32, #tpu.memory_space<vmem>>, vector<1x16x32xf32>,
    return
  }
  func.func @transform_0(%arg0: i32) -> i32 {
    %c0_i32 = arith.constant 0 : i32
    %c0_i32_0 = arith.constant 0 : i32
    return %c0_i32 : i32
  }
  func.func @transform_1(%arg0: i32) -> (i32, i32, i32) {
    %c0_i32 = arith.constant 0 : i32
    %c0_i32_0 = arith.constant 0 : i32
    %c0_i32_1 = arith.constant 0 : i32
    return %arg0, %c0_i32, %c0_i32_0 : i32, i32, i32
  }
  func.func @transform_2(%arg0: i32) -> (i32, i32, i32) {
    %c0_i32 = arith.constant 0 : i32
    %c0_i32_0 = arith.constant 0 : i32
    %c0_i32_1 = arith.constant 0 : i32
    return %arg0, %c0_i32, %c0_i32_0 : i32, i32, i32
  }
  func.func @transform_3(%arg0: i32) -> (i32, i32) {
    %c0_i32 = arith.constant 0 : i32
    %c0_i32_0 = arith.constant 0 : i32
    %c0_i32_1 = arith.constant 0 : i32
    return %c0_i32, %c0_i32_0 : i32, i32
  }
  func.func @transform_4(%arg0: i32) -> (i32, i32) {
    %c0_i32 = arith.constant 0 : i32
    %c0_i32_0 = arith.constant 0 : i32
    %c0_i32_1 = arith.constant 0 : i32
    return %c0_i32, %c0_i32_0 : i32, i32
  }
  func.func @transform_5(%arg0: i32) -> (i32, i32, i32) {
    %c0_i32 = arith.constant 0 : i32
    %c0_i32_0 = arith.constant 0 : i32
    %c0_i32_1 = arith.constant 0 : i32
    return %arg0, %c0_i32, %c0_i32_0 : i32, i32, i32
  }
}

</mosaic_0001>

<llo_original>
// kernel: tpu_custom_call.1
$region0: #{tpu_custom_call.1}
  #allocation0 [shape = 'u32[]', space=smem, size = 0x4, offset = 0x4, fixed_abs, tag = 'smem constant byte address 0x4 - core index']
  #allocation1 [shape = 'u32[144,128]{1,0:T(1,128)}', space=vmem, size = 0x12000, scoped, tag = 'internal scratch']
  %s0 = inlined_call_operand.hbm [shape: f32[2], index: 0, kind: input, shape index: {}]
  %s1 = inlined_call_operand.hbm [shape: f32[2,16,32], index: 1, kind: input, shape index: {}]
  %s2 = inlined_call_operand.hbm [shape: f32[2,16,32], index: 2, kind: input, shape index: {}]
  %s3 = inlined_call_operand.hbm [shape: f32[16,32], index: 3, kind: input, shape index: {}]
  %s4 = inlined_call_operand.hbm [shape: f32[16,32], index: 4, kind: input, shape index: {}]
  %s5 = inlined_call_operand.hbm [shape: f32[2,16,32], index: 5, kind: output, shape index: {}]
  %s6 = sld [smem:[#allocation0]]
  $region73: #{tpu_custom_call.1} parent=0
    _
  %s8 = ssub.s32 1, %s6
  %s9 = scalar_select 0, %s8, %s6
  $region1: #{tpu_custom_call.1} parent=0
    #allocation2 [shape = 'u8[512]{0}', space=smem, size = 0x200, scoped, tag = 'input window, operand 0, single buffered']
    #allocation3 [shape = 's32[2]{0}', space=sflag, size = 0x8, scoped, tag = 'scoped memory for tpu_custom_call.1']
    #allocation4 [shape = 's32[2]{0}', space=sflag, size = 0x8, scoped, tag = 'scoped memory for tpu_custom_call.1']
    #allocation5 [shape = 's32[2]{0}', space=sflag, size = 0x8, scoped, tag = 'scoped memory for tpu_custom_call.1']
    #allocation6 [shape = 'u8[16384]{0}', space=vmem, size = 0x4000, scoped, tag = 'input window, operand 1']
    #allocation7 [shape = 'u8[16384]{0}', space=vmem, size = 0x4000, scoped, tag = 'input window, operand 2']
    #allocation8 [shape = 's32[2]{0}', space=sflag, size = 0x8, scoped, tag = 'scoped memory for tpu_custom_call.1']
    #allocation9 [shape = 'u8[8192]{0}', space=vmem, size = 0x2000, scoped, tag = 'input window, operand 3, single buffered']
    #allocation10 [shape = 'u8[8192]{0}', space=vmem, size = 0x2000, scoped, tag = 'input window, operand 4, single buffered']
    #allocation11 [shape = 's32[1]{0}', space=sflag, size = 0x4, scoped, tag = 'scoped memory for tpu_custom_call.1']
    #allocation12 [shape = 'u8[16384]{0}', space=vmem, size = 0x4000, scoped, tag = 'output window, operand 0']
    %10 = vsyncpa [#allocation5], 0
    %11 = vsyncpa [#allocation3], 0
    %s12 = scalar_lea.sflag [#allocation3], 1
    %13 = vsyncpa %s12, 0
    %14 = vsyncpa [#allocation8], 0
    %s15 = scalar_lea.sflag [#allocation8], 1
    %16 = vsyncpa %s15, 0
    %17 = vsyncpa [#allocation11], 0
    %18 = vsyncpa [#allocation4], 0
    %s19 = scalar_lea.sflag [#allocation4], 1
    %20 = vsyncpa %s19, 0
    loop: start=0, step=1, limit=4
    $region2: #{tpu_custom_call.1} parent=1 // loop_pre_header
      _
    $region3: #{tpu_custom_call.1} parent=1 // loop_header
      %s22 = sphi 0, %s26
      %p23 = scmp.ge.s32.totalorder %s22, 4
      %s30 = sphi 0, %s30
      %s32 = sphi 0, %s30
      %s33 = sphi 0, %s32
      %s47 = sphi 0, %s33
      %s53 = sphi 0, %s55
      %s56 = sphi 0, %s53
      %s57 = sphi 0, %s56
      %s73 = sphi 0, %s57
      %s79 = sphi 0, %s81
      %s82 = sphi 0, %s79
      %s83 = sphi 0, %s82
      %s99 = sphi 0, %s83
      %s103 = sphi 0, %s103
      %s105 = sphi 0, %s103
      %s106 = sphi 0, %s105
      %s120 = sphi 0, %s106
      %s124 = sphi 0, %s124
      %s126 = sphi 0, %s124
      %s127 = sphi 0, %s126
      %s141 = sphi 0, %s127
      %s147 = sphi 0, %s149
      %s150 = sphi 0, %s147
      %s151 = sphi 0, %s150
      %s167 = sphi 0, %s151
    $region4: #{tpu_custom_call.1} parent=1 // loop_header_branch
      %25 = sbr.rel (%p23) target = $region8
    $region5: #{tpu_custom_call.1} parent=1 // loop_body
      %s27 = ssub.s32 %s22, 1
      %s28 = ssub.s32 %s22, 2
      %s29 = sadd.s32 %s22, 1
      %s31 = sadd.s32 %s30, 1
      %p34 = scmp.eq.s32.totalorder %s22, 1
      %p35 = scmp.ne.s32.totalorder %s30, %s32
      %p36 = scmp.eq.s32.totalorder %s22, 0
      %p37 = por %p35, %p36
      %p38 = scmp.ne.s32.totalorder %s30, %s32
      %p39 = scmp.eq.s32.totalorder %s27, 1
      %p40 = por %p38, %p39
      %p41 = scmp.ne.s32.totalorder %s32, %s33
      %p42 = scmp.eq.s32.totalorder %s27, 0
      %p43 = por %p41, %p42
      %p44 = scmp.ne.s32.totalorder %s32, %s33
      %p45 = scmp.eq.s32.totalorder %s28, 1
      %p46 = por %p44, %p45
      %p48 = scmp.ne.s32.totalorder %s33, %s47
      %p49 = scmp.eq.s32.totalorder %s28, 0
      %p50 = por %p48, %p49
      %s51 = ssub.s32 %s22, %s29
      %p52 = scmp.eq.s32.totalorder %s51, 0
      %s54 = sadd.s32 %s53, 1
      %s55 = scalar_select %p52, %s53, %s54
      %p58 = pneg %p52
      %p59 = scmp.eq.s32.totalorder %s22, 1
      %p60 = por %p58, %p59
      %p61 = scmp.ne.s32.totalorder %s53, %s56
      %p62 = scmp.eq.s32.totalorder %s22, 0
      %p63 = por %p61, %p62
      %p64 = scmp.ne.s32.totalorder %s53, %s56
      %p65 = scmp.eq.s32.totalorder %s27, 1
      %p66 = por %p64, %p65
      %p67 = scmp.ne.s32.totalorder %s56, %s57
      %p68 = scmp.eq.s32.totalorder %s27, 0
      %p69 = por %p67, %p68
      %p70 = scmp.ne.s32.totalorder %s56, %s57
      %p71 = scmp.eq.s32.totalorder %s28, 1
      %p72 = por %p70, %p71
      %p74 = scmp.ne.s32.totalorder %s57, %s73
      %p75 = scmp.eq.s32.totalorder %s28, 0
      %p76 = por %p74, %p75
      %s77 = ssub.s32 %s22, %s29
      %p78 = scmp.eq.s32.totalorder %s77, 0
      %s80 = sadd.s32 %s79, 1
      %s81 = scalar_select %p78, %s79, %s80
      %p84 = pneg %p78
      %p85 = scmp.eq.s32.totalorder %s22, 1
      %p86 = por %p84, %p85
      %p87 = scmp.ne.s32.totalorder %s79, %s82
      %p88 = scmp.eq.s32.totalorder %s22, 0
      %p89 = por %p87, %p88
      %p90 = scmp.ne.s32.totalorder %s79, %s82
      %p91 = scmp.eq.s32.totalorder %s27, 1
      %p92 = por %p90, %p91
      %p93 = scmp.ne.s32.totalorder %s82, %s83
      %p94 = scmp.eq.s32.totalorder %s27, 0
      %p95 = por %p93, %p94
      %p96 = scmp.ne.s32.totalorder %s82, %s83
      %p97 = scmp.eq.s32.totalorder %s28, 1
      %p98 = por %p96, %p97
      %p100 = scmp.ne.s32.totalorder %s83, %s99
      %p101 = scmp.eq.s32.totalorder %s28, 0
      %p102 = por %p100, %p101
      %s104 = sadd.s32 %s103, 1
      %p107 = scmp.eq.s32.totalorder %s22, 1
      %p108 = scmp.ne.s32.totalorder %s103, %s105
      %p109 = scmp.eq.s32.totalorder %s22, 0
      %p110 = por %p108, %p109
      %p111 = scmp.ne.s32.totalorder %s103, %s105
      %p112 = scmp.eq.s32.totalorder %s27, 1
      %p113 = por %p111, %p112
      %p114 = scmp.ne.s32.totalorder %s105, %s106
      %p115 = scmp.eq.s32.totalorder %s27, 0
      %p116 = por %p114, %p115
      %p117 = scmp.ne.s32.totalorder %s105, %s106
      %p118 = scmp.eq.s32.totalorder %s28, 1
      %p119 = por %p117, %p118
      %p121 = scmp.ne.s32.totalorder %s106, %s120
      %p122 = scmp.eq.s32.totalorder %s28, 0
      %p123 = por %p121, %p122
      %s125 = sadd.s32 %s124, 1
      %p128 = scmp.eq.s32.totalorder %s22, 1
      %p129 = scmp.ne.s32.totalorder %s124, %s126
      %p130 = scmp.eq.s32.totalorder %s22, 0
      %p131 = por %p129, %p130
      %p132 = scmp.ne.s32.totalorder %s124, %s126
      %p133 = scmp.eq.s32.totalorder %s27, 1
      %p134 = por %p132, %p133
      %p135 = scmp.ne.s32.totalorder %s126, %s127
      %p136 = scmp.eq.s32.totalorder %s27, 0
      %p137 = por %p135, %p136
      %p138 = scmp.ne.s32.totalorder %s126, %s127
      %p139 = scmp.eq.s32.totalorder %s28, 1
      %p140 = por %p138, %p139
      %p142 = scmp.ne.s32.totalorder %s127, %s141
      %p143 = scmp.eq.s32.totalorder %s28, 0
      %p144 = por %p142, %p143
      %s145 = ssub.s32 %s22, %s29
      %p146 = scmp.eq.s32.totalorder %s145, 0
      %s148 = sadd.s32 %s147, 1
      %s149 = scalar_select %p146, %s147, %s148
      %p152 = pneg %p146
      %p153 = scmp.eq.s32.totalorder %s22, 1
      %p154 = por %p152, %p153
      %p155 = scmp.ne.s32.totalorder %s147, %s150
      %p156 = scmp.eq.s32.totalorder %s22, 0
      %p157 = por %p155, %p156
      %p158 = scmp.ne.s32.totalorder %s147, %s150
      %p159 = scmp.eq.s32.totalorder %s27, 1
      %p160 = por %p158, %p159
      %p161 = scmp.ne.s32.totalorder %s150, %s151
      %p162 = scmp.eq.s32.totalorder %s27, 0
      %p163 = por %p161, %p162
      %p164 = scmp.ne.s32.totalorder %s150, %s151
      %p165 = scmp.eq.s32.totalorder %s28, 1
      %p166 = por %p164, %p165
      %p168 = scmp.ne.s32.totalorder %s151, %s167
      %p169 = scmp.eq.s32.totalorder %s28, 0
      %p170 = por %p168, %p169
      %p171 = scmp.le.s32.totalorder 1, %s22
      %p172 = scmp.lt.s32.totalorder %s22, 3
      %p173 = pnand %p171, %p172
      %p174 = pneg %p173
      // Predicated region
      $region9: #{tpu_custom_call.1} parent=5 // pred_check
        _
      $region10: #{tpu_custom_call.1} parent=5 // pred_check_branch
        %176 = sbr.rel (%p173) target = $region12
      $region11: #{tpu_custom_call.1} parent=5 // pred_region
        %s177 = ssub.s32 %s22, 1
        // Predicated region
        $region13: #{tpu_custom_call.1} parent=11 // pred_check
          %p178 = pneg %p43
        $region14: #{tpu_custom_call.1} parent=11 // pred_check_branch
          %180 = sbr.rel (%p178) target = $region16
        $region15: #{tpu_custom_call.1} parent=11 // pred_region
          %s182 = ssub.s32 16, 16
          %183 = vsyncadd [#allocation5], %s182
          %186 = dma.hbm_to_smem %s0, 16, [#allocation2], [#allocation5]
        $region16: #{tpu_custom_call.1} parent=11 // pred_fallthru
          _
        // Predicated region
        $region17: #{tpu_custom_call.1} parent=11 // pred_check
          %p187 = pneg %p116
        $region18: #{tpu_custom_call.1} parent=11 // pred_check_branch
          %189 = sbr.rel (%p187) target = $region20
        $region19: #{tpu_custom_call.1} parent=11 // pred_region
          %s191 = ssub.s32 256, 256
          %192 = vsyncadd [#allocation8], %s191
          %s193 = sshll.u32 [#allocation9], 4
          %s194 = int_to_ptr.vmem [resolvable:$true] %s193
          %199 = dma.hbm_to_vmem [thread:$0]  %s3, 256, %s194, [#allocation8], 128, 128, 8
        $region20: #{tpu_custom_call.1} parent=11 // pred_fallthru
          _
        // Predicated region
        $region21: #{tpu_custom_call.1} parent=11 // pred_check
          %p200 = pneg %p137
        $region22: #{tpu_custom_call.1} parent=11 // pred_check_branch
          %202 = sbr.rel (%p200) target = $region24
        $region23: #{tpu_custom_call.1} parent=11 // pred_region
          %s204 = ssub.s32 256, 256
          %205 = vsyncadd [#allocation11], %s204
          %s206 = sshll.u32 [#allocation10], 4
          %s207 = int_to_ptr.vmem [resolvable:$true] %s206
          %212 = dma.hbm_to_vmem [thread:$0]  %s4, 256, %s207, [#allocation11], 128, 128, 8
        $region24: #{tpu_custom_call.1} parent=11 // pred_fallthru
          _
      $region12: #{tpu_custom_call.1} parent=5 // pred_fallthru
        _
      %p213 = scmp.lt.s32.totalorder %s22, 2
      // Predicated region
      $region25: #{tpu_custom_call.1} parent=5 // pred_check
        %p214 = pneg %p213
      $region26: #{tpu_custom_call.1} parent=5 // pred_check_branch
        %216 = sbr.rel (%p214) target = $region28
      $region27: #{tpu_custom_call.1} parent=5 // pred_region
        // Predicated region
        $region29: #{tpu_custom_call.1} parent=27 // pred_check
          %p217 = pneg %p63
        $region30: #{tpu_custom_call.1} parent=27 // pred_check_branch
          %219 = sbr.rel (%p217) target = $region32
        $region31: #{tpu_custom_call.1} parent=27 // pred_region
          %s220 = sand.u32 %s53, 1
          %s221 = scalar_lea.sflag [#allocation3], %s220
          %s222 = sand.u32 %s53, 1
          %s223 = smul.addr %s222, 16
          %s224 = scalar_lea.vmem [#allocation6], %s223
          %s226 = ssub.s32 256, 256
          %227 = vsyncadd %s221, %s226
          %s228 = smul.addr %s22, 2
          %s229 = smul.addr %s228, 128
          %s230 = scalar_lea.hbm %s1, %s229
          %s231 = sshll.u32 %s224, 4
          %s232 = int_to_ptr.vmem [resolvable:$true] %s231
          %237 = dma.hbm_to_vmem [thread:$0]  %s230, 256, %s232, %s221, 128, 128, 8
        $region32: #{tpu_custom_call.1} parent=27 // pred_fallthru
          _
        // Predicated region
        $region33: #{tpu_custom_call.1} parent=27 // pred_check
          %p238 = pneg %p89
        $region34: #{tpu_custom_call.1} parent=27 // pred_check_branch
          %240 = sbr.rel (%p238) target = $region36
        $region35: #{tpu_custom_call.1} parent=27 // pred_region
          %s241 = sand.u32 %s22, 1
          %s242 = scalar_lea.sflag [#allocation8], %s241
          %s243 = sand.u32 %s79, 1
          %s244 = smul.addr %s243, 16
          %s245 = scalar_lea.vmem [#allocation7], %s244
          %s247 = ssub.s32 256, 256
          %248 = vsyncadd %s242, %s247
          %s249 = smul.addr %s22, 2
          %s250 = smul.addr %s249, 128
          %s251 = scalar_lea.hbm %s2, %s250
          %s252 = sshll.u32 %s245, 4
          %s253 = int_to_ptr.vmem [resolvable:$true] %s252
          %258 = dma.hbm_to_vmem [thread:$0]  %s251, 256, %s253, %s242, 128, 128, 8
        $region36: #{tpu_custom_call.1} parent=27 // pred_fallthru
          _
      $region28: #{tpu_custom_call.1} parent=5 // pred_fallthru
        _
      %p259 = scmp.le.s32.totalorder 1, %s22
      %p260 = scmp.lt.s32.totalorder %s22, 3
      %p261 = pnand %p259, %p260
      %p262 = pneg %p261
      // Predicated region
      $region37: #{tpu_custom_call.1} parent=5 // pred_check
        _
      $region38: #{tpu_custom_call.1} parent=5 // pred_check_branch
        %264 = sbr.rel (%p261) target = $region40
      $region39: #{tpu_custom_call.1} parent=5 // pred_region
        %s265 = ssub.s32 %s22, 1
        // Predicated region
        $region41: #{tpu_custom_call.1} parent=39 // pred_check
          %p266 = pneg %p43
        $region42: #{tpu_custom_call.1} parent=39 // pred_check_branch
          %268 = sbr.rel (%p266) target = $region44
        $region43: #{tpu_custom_call.1} parent=39 // pred_region
          %269 = dma.done [#allocation5], 16
        $region44: #{tpu_custom_call.1} parent=39 // pred_fallthru
          _
        %s270 = sand.u32 %s56, 1
        %s271 = scalar_lea.sflag [#allocation3], %s270
        %s272 = sand.u32 %s56, 1
        %s273 = smul.addr %s272, 16
        %s274 = scalar_lea.vmem [#allocation6], %s273
        // Predicated region
        $region45: #{tpu_custom_call.1} parent=39 // pred_check
          %p275 = pneg %p69
        $region46: #{tpu_custom_call.1} parent=39 // pred_check_branch
          %277 = sbr.rel (%p275) target = $region48
        $region47: #{tpu_custom_call.1} parent=39 // pred_region
          %278 = dma.done %s271, 256
        $region48: #{tpu_custom_call.1} parent=39 // pred_fallthru
          _
        %s279 = sand.u32 %s27, 1
        %s280 = scalar_lea.sflag [#allocation8], %s279
        %s281 = sand.u32 %s82, 1
        %s282 = smul.addr %s281, 16
        %s283 = scalar_lea.vmem [#allocation7], %s282
        // Predicated region
        $region49: #{tpu_custom_call.1} parent=39 // pred_check
          %p284 = pneg %p95
        $region50: #{tpu_custom_call.1} parent=39 // pred_check_branch
          %286 = sbr.rel (%p284) target = $region52
        $region51: #{tpu_custom_call.1} parent=39 // pred_region
          %287 = dma.done %s280, 256
        $region52: #{tpu_custom_call.1} parent=39 // pred_fallthru
          _
        // Predicated region
        $region53: #{tpu_custom_call.1} parent=39 // pred_check
          %p288 = pneg %p116
        $region54: #{tpu_custom_call.1} parent=39 // pred_check_branch
          %290 = sbr.rel (%p288) target = $region56
        $region55: #{tpu_custom_call.1} parent=39 // pred_region
          %291 = dma.done [#allocation8], 256
        $region56: #{tpu_custom_call.1} parent=39 // pred_fallthru
          _
        // Predicated region
        $region57: #{tpu_custom_call.1} parent=39 // pred_check
          %p292 = pneg %p137
        $region58: #{tpu_custom_call.1} parent=39 // pred_check_branch
          %294 = sbr.rel (%p292) target = $region60
        $region59: #{tpu_custom_call.1} parent=39 // pred_region
          %295 = dma.done [#allocation11], 256
        $region60: #{tpu_custom_call.1} parent=39 // pred_fallthru
          _
        %296 = sfence
        %p297 = pneg %p43
        %p298 = pneg %p40
        %s299 = sand.u32 %s56, 1
        %s300 = scalar_lea.sflag [#allocation3], %s299
        %s301 = sand.u32 %s56, 1
        %s302 = smul.addr %s301, 16
        %s303 = scalar_lea.vmem [#allocation6], %s302
        %p304 = pneg %p69
        %p305 = pneg %p66
        %s306 = sand.u32 %s27, 1
        %s307 = scalar_lea.sflag [#allocation8], %s306
        %s308 = sand.u32 %s82, 1
        %s309 = smul.addr %s308, 16
        %s310 = scalar_lea.vmem [#allocation7], %s309
        %p311 = pneg %p95
        %p312 = pneg %p92
        %p313 = pneg %p116
        %p314 = pneg %p113
        %p315 = pneg %p137
        %p316 = pneg %p134
        %p317 = pneg %p163
        %p318 = pneg %p160
        %s319 = sand.u32 %s150, 1
        %s320 = scalar_lea.sflag [#allocation4], %s319
        %s321 = sand.u32 %s150, 1
        %s322 = smul.addr %s321, 16
        %s323 = scalar_lea.vmem [#allocation12], %s322
        %s324 = sld [smem:[#allocation2]]
        %s325 = sld [smem:[#allocation2 + $0x1]]
        %v326 = vld [vmem:[%s274] sm:$0xff]
        %v327 = vld [vmem:[%s274 + $0x8] sm:$0xff]
        %v328 = vld [vmem:[%s283] sm:$0xff]
        %v329 = vld [vmem:[%s283 + $0x8] sm:$0xff]
        %v330 = vld [vmem:[#allocation9] sm:$0xff]
        %v331 = vld [vmem:[#allocation9 + $0x8] sm:$0xff]
        %v332 = vld [vmem:[#allocation10] sm:$0xff]
        %v333 = vld [vmem:[#allocation10 + $0x8] sm:$0xff]
        %v334 = vstv %s324
        %v335 = vsub.f32 %v332, %v334
        %v336 = vsub.f32 %v333, %v334
        %v337 = vstv %s325
        %v338 = vmul.f32 %v335, %v337
        %v339 = vmul.f32 %v336, %v337
        %v340 = vadd.f32 %v330, %v338
        %v341 = vadd.f32 %v331, %v339
        %v342 = vadd.f32 %v328, %v326
        %v343 = vadd.f32 %v329, %v327
        %v344 = vadd.f32 %v342, %v326
        %v345 = vadd.f32 %v343, %v327
        %v346 = vadd.f32 %v344, %v340
        %v347 = vadd.f32 %v345, %v341
        %vm348 = vcmask 261120
        %349 = vst.msk [vmem:[%s323] sm:$0xff] %vm348, %v346
        %350 = vst.msk [vmem:[%s323 + $0x8] sm:$0xff] %vm348, %v347
        %s351 = sand.u32 %s150, 1
        %s352 = scalar_lea.sflag [#allocation4], %s351
        %s353 = sand.u32 %s150, 1
        %s354 = smul.addr %s353, 16
        %s355 = scalar_lea.vmem [#allocation12], %s354
        // Predicated region
        $region61: #{tpu_custom_call.1} parent=39 // pred_check
          %p356 = pneg %p160
        $region62: #{tpu_custom_call.1} parent=39 // pred_check_branch
          %358 = sbr.rel (%p356) target = $region64
        $region63: #{tpu_custom_call.1} parent=39 // pred_region
          %s360 = ssub.s32 256, 256
          %361 = vsyncadd %s352, %s360
          %s362 = smul.addr %s27, 2
          %s363 = smul.addr %s362, 128
          %s364 = scalar_lea.hbm %s5, %s363
          %s365 = sshll.u32 %s355, 4
          %s366 = int_to_ptr.vmem [resolvable:$true] %s365
          %371 = dma.vmem_to_hbm [thread:$0]  %s366, 256, %s364, %s352, 128, 128, 8
        $region64: #{tpu_custom_call.1} parent=39 // pred_fallthru
          _
      $region40: #{tpu_custom_call.1} parent=5 // pred_fallthru
        _
      %p372 = scmp.le.s32.totalorder 2, %s22
      // Predicated region
      $region65: #{tpu_custom_call.1} parent=5 // pred_check
        %p373 = pneg %p372
      $region66: #{tpu_custom_call.1} parent=5 // pred_check_branch
        %375 = sbr.rel (%p373) target = $region68
      $region67: #{tpu_custom_call.1} parent=5 // pred_region
        %s376 = ssub.s32 %s22, 2
        // Predicated region
        $region69: #{tpu_custom_call.1} parent=67 // pred_check
          %p377 = pneg %p166
        $region70: #{tpu_custom_call.1} parent=67 // pred_check_branch
          %379 = sbr.rel (%p377) target = $region72
        $region71: #{tpu_custom_call.1} parent=67 // pred_region
          %s380 = sand.u32 %s151, 1
          %s381 = scalar_lea.sflag [#allocation4], %s380
          %s382 = sand.u32 %s151, 1
          %s383 = smul.addr %s382, 16
          %s384 = scalar_lea.vmem [#allocation12], %s383
          %385 = dma.done %s381, 256
        $region72: #{tpu_custom_call.1} parent=67 // pred_fallthru
          _
      $region68: #{tpu_custom_call.1} parent=5 // pred_fallthru
        _
    $region6: #{tpu_custom_call.1} parent=1 // loop_footer
      %s26 = sadd.s32 1, %s22
    $region7: #{tpu_custom_call.1} parent=1 // loop_footer_branch
      %21 = sbr.rel target = $region3
    $region8: #{tpu_custom_call.1} parent=1 // loop_exit
      _
    %386 = vsyncpa [#allocation3], 1
    %s387 = scalar_lea.sflag [#allocation3], 1
    %388 = vsyncpa %s387, 1
    %389 = vsyncpa [#allocation8], 1
    %s390 = scalar_lea.sflag [#allocation8], 1
    %391 = vsyncpa %s390, 1
    %392 = vsyncpa [#allocation11], 1
    %393 = vsyncpa [#allocation4], 1
    %s394 = scalar_lea.sflag [#allocation4], 1
    %395 = vsyncpa %s394, 1
    %396 = vsyncpa [#allocation5], 1
    %s397 = scalar_lea.sflag [#allocation5], 1
    %398 = vsyncpa %s397, 1

</llo_original>
